<compile_context>
chip_gen: v7x
topology: tpu7x:2x2x1
jax: 0.10.0
libtpu: 0.0.40
codegen_flags: <defaults>
</compile_context>

<pallas_src>
from functools import partial

import jax
import jax.numpy as jnp
from jax.experimental import pallas as pl
from jax.experimental.pallas import tpu as pltpu

BN_EPS = 1e-5


def stdconv_kernel(x_ref, scale_ref, shift_ref, w_ref, b_ref, out_ref, pad_ref,
                   *, K, P, stride, HO):
    """Fused BN(scale/shift) -> ReLU -> Conv2d for Nb images (one grid step).

    x_ref:     (Nb, H, W*Cin)       f32   activations, W & Cin folded into lanes
    scale_ref: (1, 1, W*Cin)        f32   per-lane BN scale  (gamma * rsqrt(var+eps))
    shift_ref: (1, 1, W*Cin)        f32   per-lane BN shift  (beta - mean*scale)
    w_ref:     (K*W*Cin, WO*Cout)   bf16  banded conv weights (W pad & stride baked in)
    b_ref:     (1, WO*Cout)         f32   conv bias tiled over WO
    out_ref:   (Nb*HO, WO*Cout)     f32   lane-dense output rows (image-major)
    pad_ref:   (Nb, Hp, W*Cin)      f32   VMEM scratch: H-padded normalised activation
    """
    Nb, H, WC = x_ref.shape
    Hp = pad_ref.shape[1]

    # ---- BatchNorm (precomputed per-channel scale/shift) + ReLU, f32 ----
    y = jnp.maximum(x_ref[...] * scale_ref[...] + shift_ref[...], 0.0)   # (Nb,H,WC)

    # ---- H-padded copy in VMEM.  W padding is baked out of the banded weight,
    #      so y lands at lane offset 0: full-width stores, no masked edge stores,
    #      no lane shift.  Only the 2*P halo rows are zeroed (each step, so the
    #      scratch is valid whichever core runs the step under "parallel"). ----
    if P > 0:
        halo = jnp.zeros((Nb, P, WC), pad_ref.dtype)
        pad_ref[:, 0:P, :] = halo
        pad_ref[:, Hp - P:Hp, :] = halo
        pad_ref[:, P:P + H, :] = y
    else:
        pad_ref[...] = y

    # ---- Conv as ONE matmul: K H-row bands per image concatenated along lanes,
    #      images stacked along M (sublanes).  The concat temp is only
    #      Nb*HO x K*W*Cin (tiny vs VMEM); one dot keeps the whole K*W*Cin
    #      contraction in a single MXU pass instead of K shallow ones. ----
    def hband(n, kh):
        if stride == 1:
            return pad_ref[n, kh:kh + HO, :]
        # Strided sublane read (XLU) for stride>1; for hot stride>1 shapes,
        # pre-compact the needed rows into the scratch once instead.
        return pad_ref[n, pl.ds(kh, HO, stride=stride), :]

    per_image = []
    for n in range(Nb):                                    # static, trace-time
        rows = [hband(n, kh) for kh in range(K)]
        per_image.append(jnp.concatenate(rows, axis=-1) if K > 1 else rows[0])
    lhs = jnp.concatenate(per_image, axis=0) if Nb > 1 else per_image[0]

    acc = jnp.dot(lhs.astype(w_ref.dtype), w_ref[...],
                  preferred_element_type=jnp.float32)      # (Nb*HO, WO*Cout) f32
    out_ref[...] = (acc + b_ref[...]).astype(out_ref.dtype)


def _pick_block_n(N, HO, *, row_target=256, row_floor=128):
    """Images stacked per grid step (matmul M = Nb*HO).

    Fill the MXU M axis toward ~row_target rows (256-row passes on v6e/v7x,
    128 on v5e); back off to >=2 grid steps (so v7x's two TensorCores both get
    work under "parallel") only if each step would still have >= row_floor rows.
    """
    want = max(1, -(-row_target // HO))                    # ceil(row_target / HO)
    nb = 1
    for cand in range(1, min(N, want) + 1):
        if N % cand == 0:
            nb = cand
    if N // nb < 2:                                        # only one grid step left
        for cand in range(nb - 1, 0, -1):
            if N % cand == 0 and N // cand >= 2 and cand * HO >= row_floor:
                nb = cand
                break
    return nb


def std_conv(x_nchw, gamma, beta, w_oihw, bias, *, stride, padding, use_bf16=True):
    """Wrapper: NCHW in/out, PyTorch-style parameters (OIHW weights)."""
    N, Cin, H, W = x_nchw.shape
    Cout, Cin_w, KH, KW = w_oihw.shape
    assert Cin_w == Cin and KH == KW, "square kernels / matching channels only"
    K, P = KH, padding
    Hp = H + 2 * P
    HO = (Hp - K) // stride + 1
    WO = (W + 2 * P - K) // stride + 1
    WC = W * Cin

    f32 = jnp.float32
    x_nchw = x_nchw.astype(f32)

    # --- BN batch statistics (training mode, biased variance): one pass over
    #     the already NHWC-transposed tensor (E[x^2]-E[x]^2), done in XLA so the
    #     kernel grid can stay "parallel" over the batch. ---
    x_nhwc = jnp.transpose(x_nchw, (0, 2, 3, 1))                        # (N,H,W,Cin)
    mean = jnp.mean(x_nhwc, axis=(0, 1, 2))
    var = jnp.mean(jnp.square(x_nhwc), axis=(0, 1, 2)) - jnp.square(mean)
    scale = gamma.astype(f32) * jax.lax.rsqrt(var + BN_EPS)             # (Cin,)
    shift = beta.astype(f32) - mean * scale                             # (Cin,)
    scale_row = jnp.tile(scale, W).reshape(1, 1, WC)
    shift_row = jnp.tile(shift, W).reshape(1, 1, WC)

    # --- Lane-friendly activation layout: (N, H, W*Cin), channels fastest.
    #     (The NCHW<->lane-layout transposes are forced by this single module's
    #      PyTorch NCHW interface; a full network would keep this layout.) ---
    x2 = x_nhwc.reshape(N, H, WC)

    # --- Banded conv weights over the UNPADDED W axis: (K*W*Cin, WO*Cout).
    #     Taps that would multiply zero-padded columns are simply omitted, so
    #     the kernel needs no W halo.  W padding and W stride are baked in. ---
    w_dtype = jnp.bfloat16 if use_bf16 else f32
    w_hwio = jnp.transpose(w_oihw, (2, 3, 1, 0)).astype(f32)            # (K,K,Cin,Cout)
    bigw = jnp.zeros((K, W, Cin, WO, Cout), f32)
    for wo in range(WO):                                                # static, trace-time
        for kw in range(K):
            w_in = wo * stride + kw - P
            if 0 <= w_in < W:
                bigw = bigw.at[:, w_in, :, wo, :].set(w_hwio[:, kw, :, :])
    bigw = bigw.reshape(K * WC, WO * Cout).astype(w_dtype)
    # NOTE: the banded weight is only ~K/W dense and scales as O(W^2) bytes; for
    # large W add a WO grid axis whose weight BlockSpec windows only the rows a
    # WO-tile touches (keeps weight VMEM O(W)), especially on v7x (64 MiB VMEM).

    bias_row = jnp.tile(bias.astype(f32), WO).reshape(1, WO * Cout)

    Nb = _pick_block_n(N, HO)
    grid = (N // Nb,)

    # --- Explicit per-step VMEM budget (v7x: 64 MiB physical / 32 MiB scoped
    #     default).  x/out blocks are double-buffered; the weight block has a
    #     constant index map so Pallas keeps it resident across grid steps. ---
    x_blk = Nb * H * WC * 4
    out_blk = Nb * HO * WO * Cout * 4
    w_bytes = int(bigw.size) * bigw.dtype.itemsize
    pad_bytes = Nb * Hp * WC * 4
    small = (2 * WC + WO * Cout) * 4
    est = 2 * (x_blk + out_blk) + w_bytes + pad_bytes + small
    vmem_limit = int(min(48 << 20, max(16 << 20, 3 * est)))

    kernel = partial(stdconv_kernel, K=K, P=P, stride=stride, HO=HO)
    out = pl.pallas_call(
        kernel,
        out_shape=jax.ShapeDtypeStruct((N * HO, WO * Cout), f32),
        grid_spec=pltpu.PrefetchScalarGridSpec(
            num_scalar_prefetch=0,
            grid=grid,
            in_specs=[
                pl.BlockSpec((Nb, H, WC), lambda n: (n, 0, 0)),
                pl.BlockSpec((1, 1, WC), lambda n: (0, 0, 0)),
                pl.BlockSpec((1, 1, WC), lambda n: (0, 0, 0)),
                pl.BlockSpec((K * WC, WO * Cout), lambda n: (0, 0)),   # resident weight
                pl.BlockSpec((1, WO * Cout), lambda n: (0, 0)),
            ],
            out_specs=pl.BlockSpec((Nb * HO, WO * Cout), lambda n: (n, 0)),
            scratch_shapes=[pltpu.VMEM((Nb, Hp, WC), f32)],
        ),
        compiler_params=pltpu.CompilerParams(
            dimension_semantics=("parallel",),
            vmem_limit_bytes=vmem_limit),
    )(x2, scale_row, shift_row, bigw, bias_row)

    # (N*HO, WO*Cout) -> NCHW
    out = out.reshape(N, HO, WO, Cout)
    return jnp.transpose(out, (0, 3, 1, 2))


def ref_std_conv(x, gamma, beta, w, b, *, stride, padding):
    """Pure-JAX reference (NCHW), mirrors PyTorch BN(train)->ReLU->Conv2d."""
    mean = jnp.mean(x, axis=(0, 2, 3), keepdims=True)
    var = jnp.mean((x - mean) ** 2, axis=(0, 2, 3), keepdims=True)
    y = (x - mean) * jax.lax.rsqrt(var + BN_EPS)
    y = y * gamma.reshape(1, -1, 1, 1) + beta.reshape(1, -1, 1, 1)
    y = jnp.maximum(y, 0.0)
    out = jax.lax.conv_general_dilated(
        y, w, (stride, stride),
        ((padding, padding), (padding, padding)),
        dimension_numbers=("NCHW", "OIHW", "NCHW"))
    return out + b.reshape(1, -1, 1, 1)


if __name__ == "__main__":
    # Module config: StdConv(C_in=4, C_out=8, kernel_size=3, stride=1, padding=1)
    N, C_in, H, W = 2, 4, 16, 16
    C_out, K, stride, padding = 8, 3, 1, 1

    key = jax.random.PRNGKey(0)
    kx, kw, kb = jax.random.split(key, 3)

    x = jax.random.normal(kx, (N, C_in, H, W), dtype=jnp.float32)

    # Deterministic parameter init (PyTorch-default-style ranges).
    gamma = jnp.ones((C_in,), jnp.float32)    # BatchNorm2d affine weight default
    beta = jnp.zeros((C_in,), jnp.float32)    # BatchNorm2d affine bias default
    fan_in = C_in * K * K
    bound = 1.0 / (fan_in ** 0.5)
    w = jax.random.uniform(kw, (C_out, C_in, K, K), jnp.float32, -bound, bound)
    b = jax.random.uniform(kb, (C_out,), jnp.float32, -bound, bound)

    out = std_conv(x, gamma, beta, w, b, stride=stride, padding=padding)
    out = jax.block_until_ready(out)

    ref = ref_std_conv(x, gamma, beta, w, b, stride=stride, padding=padding)
    assert out.shape == ref.shape, (out.shape, ref.shape)
    # bf16 matmul operands (f32 accumulation) -> looser tolerance than pure f32.
    assert jnp.allclose(out, ref, atol=2e-2, rtol=2e-2), \
        float(jnp.max(jnp.abs(out - ref)))

    print("KERNEL_OK")
</pallas_src>

<mosaic_0001>
module attributes {stable_mosaic.version = 11 : i64} {
  func.func @stdconv_kernel(%arg0: i32, %arg1: memref<2x16x64xf32, #tpu.memory_space<vmem>>, %arg2: memref<1x1x64xf32, #tpu.memory_space<vmem>>, %arg3: memref<1x1x64xf32, #tpu.memory_space<vmem>>, %arg4: memref<192x128xbf16, #tpu.memory_space<vmem>>, %arg5: memref<1x128xf32, #tpu.memory_space<vmem>>, %arg6: memref<32x128xf32, #tpu.memory_space<vmem>>, %arg7: memref<2x18x64xf32, #tpu.memory_space<vmem>>) attributes {dimension_semantics = [#tpu.dimension_semantics<parallel>], iteration_bounds = array<i64: 1>, scalar_prefetch = 0 : i64, scratch_operands = 1 : i64, tpu.core_type = #tpu.core_type<tc>, window_params = [{transform_indices = @transform_0, window_bounds = array<i64: 2, 16, 64>}, {pipeline_mode = #tpu.pipeline_mode<synchronous>, transform_indices = @transform_1, window_bounds = array<i64: 1, 1, 64>}, {pipeline_mode = #tpu.pipeline_mode<synchronous>, transform_indices = @transform_2, window_bounds = array<i64: 1, 1, 64>}, {pipeline_mode = #tpu.pipeline_mode<synchronous>, transform_indices = @transform_3, window_bounds = array<i64: 192, 128>}, {pipeline_mode = #tpu.pipeline_mode<synchronous>, transform_indices = @transform_4, window_bounds = array<i64: 1, 128>}, {transform_indices = @transform_5, window_bounds = array<i64: 32, 128>}]} {
    %c0 = arith.constant 0 : index
    %c0_0 = arith.constant 0 : index
    %c0_1 = arith.constant 0 : index
    %0 = vector.load %arg1[%c0, %c0_0, %c0_1] : memref<2x16x64xf32, #tpu.memory_space<vmem>>, vector<2x16x64xf32>
    %c0_2 = arith.constant 0 : index
    %c0_3 = arith.constant 0 : index
    %c0_4 = arith.constant 0 : index
    %1 = vector.load %arg2[%c0_2, %c0_3, %c0_4] : memref<1x1x64xf32, #tpu.memory_space<vmem>>, vector<1x1x64xf32>
    %2 = vector.broadcast %1 : vector<1x1x64xf32> to vector<2x16x64xf32>
    %3 = arith.mulf %0, %2 : vector<2x16x64xf32>
    %c0_5 = arith.constant 0 : index
    %c0_6 = arith.constant 0 : index
    %c0_7 = arith.constant 0 : index
    %4 = vector.load %arg3[%c0_5, %c0_6, %c0_7] : memref<1x1x64xf32, #tpu.memory_space<vmem>>, vector<1x1x64xf32>
    %5 = vector.broadcast %4 : vector<1x1x64xf32> to vector<2x16x64xf32>
    %6 = arith.addf %3, %5 : vector<2x16x64xf32>
    %cst = arith.constant 0.000000e+00 : f32
    %7 = vector.broadcast %cst : f32 to vector<2x16x64xf32>
    %8 = arith.maximumf %6, %7 : vector<2x16x64xf32>
    %cst_8 = arith.constant 0.000000e+00 : f32
    %9 = vector.broadcast %cst_8 : f32 to vector<2x1x64xf32>
    %c0_9 = arith.constant 0 : index
    %c0_10 = arith.constant 0 : index
    %c0_11 = arith.constant 0 : index
    %10 = vector.load %arg7[%c0_9, %c0_10, %c0_11] : memref<2x18x64xf32, #tpu.memory_space<vmem>>, vector<2x1x64xf32>
    tpu.vector_store %arg7[%c0_9, %c0_10, %c0_11], %9 {strides = array<i32>} : memref<2x18x64xf32, #tpu.memory_space<vmem>>, vector<2x1x64xf32>,
    %c0_12 = arith.constant 0 : index
    %c17 = arith.constant 17 : index
    %c0_13 = arith.constant 0 : index
    %11 = vector.load %arg7[%c0_12, %c17, %c0_13] : memref<2x18x64xf32, #tpu.memory_space<vmem>>, vector<2x1x64xf32>
    tpu.vector_store %arg7[%c0_12, %c17, %c0_13], %9 {strides = array<i32>} : memref<2x18x64xf32, #tpu.memory_space<vmem>>, vector<2x1x64xf32>,
    %c0_14 = arith.constant 0 : index
    %c1 = arith.constant 1 : index
    %c0_15 = arith.constant 0 : index
    %12 = vector.load %arg7[%c0_14, %c1, %c0_15] : memref<2x18x64xf32, #tpu.memory_space<vmem>>, vector<2x16x64xf32>
    tpu.vector_store %arg7[%c0_14, %c1, %c0_15], %8 {strides = array<i32>} : memref<2x18x64xf32, #tpu.memory_space<vmem>>, vector<2x16x64xf32>,
    %c0_16 = arith.constant 0 : index
    %c0_17 = arith.constant 0 : index
    %c0_18 = arith.constant 0 : index
    %13 = vector.load %arg7[%c0_16, %c0_17, %c0_18] : memref<2x18x64xf32, #tpu.memory_space<vmem>>, vector<1x16x64xf32>
    %14 = vector.shape_cast %13 : vector<1x16x64xf32> to vector<16x64xf32>
    %c0_19 = arith.constant 0 : index
    %c1_20 = arith.constant 1 : index
    %c0_21 = arith.constant 0 : index
    %15 = vector.load %arg7[%c0_19, %c1_20, %c0_21] : memref<2x18x64xf32, #tpu.memory_space<vmem>>, vector<1x16x64xf32>
    %16 = vector.shape_cast %15 : vector<1x16x64xf32> to vector<16x64xf32>
    %c0_22 = arith.constant 0 : index
    %c2 = arith.constant 2 : index
    %c0_23 = arith.constant 0 : index
    %17 = vector.load %arg7[%c0_22, %c2, %c0_23] : memref<2x18x64xf32, #tpu.memory_space<vmem>>, vector<1x16x64xf32>
    %18 = vector.shape_cast %17 : vector<1x16x64xf32> to vector<16x64xf32>
    %19 = tpu.concatenate %14, %16, %18 in 1 : vector<16x64xf32>, vector<16x64xf32>, vector<16x64xf32> -> vector<16x192xf32>
    %c1_24 = arith.constant 1 : index
    %c0_25 = arith.constant 0 : index
    %c0_26 = arith.constant 0 : index
    %20 = vector.load %arg7[%c1_24, %c0_25, %c0_26] : memref<2x18x64xf32, #tpu.memory_space<vmem>>, vector<1x16x64xf32>
    %21 = vector.shape_cast %20 : vector<1x16x64xf32> to vector<16x64xf32>
    %c1_27 = arith.constant 1 : index
    %c1_28 = arith.constant 1 : index
    %c0_29 = arith.constant 0 : index
    %22 = vector.load %arg7[%c1_27, %c1_28, %c0_29] : memref<2x18x64xf32, #tpu.memory_space<vmem>>, vector<1x16x64xf32>
    %23 = vector.shape_cast %22 : vector<1x16x64xf32> to vector<16x64xf32>
    %c1_30 = arith.constant 1 : index
    %c2_31 = arith.constant 2 : index
    %c0_32 = arith.constant 0 : index
    %24 = vector.load %arg7[%c1_30, %c2_31, %c0_32] : memref<2x18x64xf32, #tpu.memory_space<vmem>>, vector<1x16x64xf32>
    %25 = vector.shape_cast %24 : vector<1x16x64xf32> to vector<16x64xf32>
    %26 = tpu.concatenate %21, %23, %25 in 1 : vector<16x64xf32>, vector<16x64xf32>, vector<16x64xf32> -> vector<16x192xf32>
    %27 = tpu.concatenate %19, %26 in 0 : vector<16x192xf32>, vector<16x192xf32> -> vector<32x192xf32>
    %28 = arith.truncf %27 : vector<32x192xf32> to vector<32x192xbf16>
    %c0_33 = arith.constant 0 : index
    %c0_34 = arith.constant 0 : index
    %29 = vector.load %arg4[%c0_33, %c0_34] : memref<192x128xbf16, #tpu.memory_space<vmem>>, vector<192x128xbf16>
    %cst_35 = arith.constant dense<0.000000e+00> : vector<32x128xf32>
    %30 = tpu.matmul %28, %29, %cst_35 {dimension_numbers = #tpu.dot_dimension_numbers<[1], [0], [0], [1], [0, 0, 1, 1], [], []>} : vector<32x192xbf16>, vector<192x128xbf16>, vector<32x128xf32> -> vector<32x128xf32>
    %c0_36 = arith.constant 0 : index
    %c0_37 = arith.constant 0 : index
    %31 = vector.load %arg5[%c0_36, %c0_37] : memref<1x128xf32, #tpu.memory_space<vmem>>, vector<1x128xf32>
    %32 = vector.broadcast %31 : vector<1x128xf32> to vector<32x128xf32>
    %33 = arith.addf %30, %32 : vector<32x128xf32>
    %c0_38 = arith.constant 0 : index
    %c0_39 = arith.constant 0 : index
    %34 = vector.load %arg6[%c0_38, %c0_39] : memref<32x128xf32, #tpu.memory_space<vmem>>, vector<32x128xf32>
    tpu.vector_store %arg6[%c0_38, %c0_39], %33 {strides = array<i32>} : memref<32x128xf32, #tpu.memory_space<vmem>>, vector<32x128xf32>,
    return
  }
  func.func @transform_0(%arg0: i32) -> (i32, i32, i32) {
    %c0_i32 = arith.constant 0 : i32
    %c0_i32_0 = arith.constant 0 : i32
    %c0_i32_1 = arith.constant 0 : i32
    return %arg0, %c0_i32, %c0_i32_0 : i32, i32, i32
  }
  func.func @transform_1(%arg0: i32) -> (i32, i32, i32) {
    %c0_i32 = arith.constant 0 : i32
    %c0_i32_0 = arith.constant 0 : i32
    %c0_i32_1 = arith.constant 0 : i32
    %c0_i32_2 = arith.constant 0 : i32
    return %c0_i32, %c0_i32_0, %c0_i32_1 : i32, i32, i32
  }
  func.func @transform_2(%arg0: i32) -> (i32, i32, i32) {
    %c0_i32 = arith.constant 0 : i32
    %c0_i32_0 = arith.constant 0 : i32
    %c0_i32_1 = arith.constant 0 : i32
    %c0_i32_2 = arith.constant 0 : i32
    return %c0_i32, %c0_i32_0, %c0_i32_1 : i32, i32, i32
  }
  func.func @transform_3(%arg0: i32) -> (i32, i32) {
    %c0_i32 = arith.constant 0 : i32
    %c0_i32_0 = arith.constant 0 : i32
    %c0_i32_1 = arith.constant 0 : i32
    return %c0_i32, %c0_i32_0 : i32, i32
  }
  func.func @transform_4(%arg0: i32) -> (i32, i32) {
    %c0_i32 = arith.constant 0 : i32
    %c0_i32_0 = arith.constant 0 : i32
    %c0_i32_1 = arith.constant 0 : i32
    return %c0_i32, %c0_i32_0 : i32, i32
  }
  func.func @transform_5(%arg0: i32) -> (i32, i32) {
    %c0_i32 = arith.constant 0 : i32
    %c0_i32_0 = arith.constant 0 : i32
    return %arg0, %c0_i32 : i32, i32
  }
}

</mosaic_0001>

<llo_original>
// kernel: tpu_custom_call.1
$region0: #{tpu_custom_call.1}
  #allocation0 [shape = 'u32[]', space=smem, size = 0x4, offset = 0x4, fixed_abs, tag = 'smem constant byte address 0x4 - core index']
  #allocation1 [shape = 'u32[144,128]{1,0:T(1,128)}', space=vmem, size = 0x12000, scoped, tag = 'internal scratch']
  #allocation2 [shape = 'f32[2,18,64]{2,1,0:T(8,128)}', space=vmem, size = 0x6000, scoped, tag = 'scratch operand']
  %s0 = inlined_call_operand.hbm [shape: f32[2,16,64], index: 0, kind: input, shape index: {}]
  %s1 = inlined_call_operand.vmem [shape: f32[1,1,64], index: 1, kind: input, shape index: {}]
  %s2 = inlined_call_operand.vmem [shape: f32[1,1,64], index: 2, kind: input, shape index: {}]
  %s3 = inlined_call_operand.hbm [shape: bf16[192,128], index: 3, kind: input, shape index: {}]
  %s4 = inlined_call_operand.vmem [shape: f32[1,128], index: 4, kind: input, shape index: {}]
  %s5 = inlined_call_operand.hbm [shape: f32[32,128], index: 5, kind: output, shape index: {}]
  %s6 = sld [smem:[#allocation0]]
  $region38: #{tpu_custom_call.1} parent=0
    _
  %s8 = ssub.s32 1, %s6
  %s9 = scalar_select 0, %s8, %s6
  $region1: #{tpu_custom_call.1} parent=0
    #allocation3 [shape = 'u8[16384]{0}', space=vmem, size = 0x4000, scoped, tag = 'input window, operand 0, single buffered']
    #allocation4 [shape = 's32[1]{0}', space=sflag, size = 0x4, scoped, tag = 'scoped memory for tpu_custom_call.1']
    #allocation5 [shape = 's32[1]{0}', space=sflag, size = 0x4, scoped, tag = 'scoped memory for tpu_custom_call.1']
    #allocation6 [shape = 'u8[49152]{0}', space=vmem, size = 0xc000, scoped, tag = 'input window, operand 3, single buffered']
    #allocation7 [shape = 's32[1]{0}', space=sflag, size = 0x4, scoped, tag = 'scoped memory for tpu_custom_call.1']
    #allocation8 [shape = 'u8[16384]{0}', space=vmem, size = 0x4000, scoped, tag = 'output window, operand 0, single buffered']
    %10 = vsyncpa [#allocation4], 0
    %11 = vsyncpa [#allocation7], 0
    %12 = vsyncpa [#allocation5], 0
    // Predicated region
    $region2: #{tpu_custom_call.1} parent=1 // pred_check
      _
    $region3: #{tpu_custom_call.1} parent=1 // pred_check_branch
      %14 = sbr.rel (0) target = $region5
    $region4: #{tpu_custom_call.1} parent=1 // pred_region
      %s16 = ssub.s32 512, 512
      %17 = vsyncadd [#allocation4], %s16
      %s18 = sshll.u32 [#allocation3], 4
      %s19 = int_to_ptr.vmem [resolvable:$true] %s18
      %24 = dma.hbm_to_vmem [thread:$0]  %s0, 512, %s19, [#allocation4], 128, 128, 8
    $region5: #{tpu_custom_call.1} parent=1 // pred_fallthru
      _
    // Predicated region
    $region6: #{tpu_custom_call.1} parent=1 // pred_check
      _
    $region7: #{tpu_custom_call.1} parent=1 // pred_check_branch
      %26 = sbr.rel (0) target = $region9
    $region8: #{tpu_custom_call.1} parent=1 // pred_region
      _
    $region9: #{tpu_custom_call.1} parent=1 // pred_fallthru
      _
    // Predicated region
    $region10: #{tpu_custom_call.1} parent=1 // pred_check
      _
    $region11: #{tpu_custom_call.1} parent=1 // pred_check_branch
      %28 = sbr.rel (0) target = $region13
    $region12: #{tpu_custom_call.1} parent=1 // pred_region
      _
    $region13: #{tpu_custom_call.1} parent=1 // pred_fallthru
      _
    // Predicated region
    $region14: #{tpu_custom_call.1} parent=1 // pred_check
      _
    $region15: #{tpu_custom_call.1} parent=1 // pred_check_branch
      %30 = sbr.rel (0) target = $region17
    $region16: #{tpu_custom_call.1} parent=1 // pred_region
      %s32 = ssub.s32 1536, 1536
      %33 = vsyncadd [#allocation7], %s32
      %s34 = sshll.u32 [#allocation6], 4
      %s35 = int_to_ptr.vmem [resolvable:$true] %s34
      %40 = dma.hbm_to_vmem [thread:$0]  %s3, 1536, %s35, [#allocation7], 64, 64, 4
    $region17: #{tpu_custom_call.1} parent=1 // pred_fallthru
      _
    // Predicated region
    $region18: #{tpu_custom_call.1} parent=1 // pred_check
      _
    $region19: #{tpu_custom_call.1} parent=1 // pred_check_branch
      %42 = sbr.rel (0) target = $region21
    $region20: #{tpu_custom_call.1} parent=1 // pred_region
      _
    $region21: #{tpu_custom_call.1} parent=1 // pred_fallthru
      _
    // Predicated region
    $region22: #{tpu_custom_call.1} parent=1 // pred_check
      _
    $region23: #{tpu_custom_call.1} parent=1 // pred_check_branch
      %44 = sbr.rel (0) target = $region25
    $region24: #{tpu_custom_call.1} parent=1 // pred_region
      %45 = dma.done [#allocation4], 512
    $region25: #{tpu_custom_call.1} parent=1 // pred_fallthru
      _
    // Predicated region
    $region26: #{tpu_custom_call.1} parent=1 // pred_check
      _
    $region27: #{tpu_custom_call.1} parent=1 // pred_check_branch
      %47 = sbr.rel (0) target = $region29
    $region28: #{tpu_custom_call.1} parent=1 // pred_region
      %48 = dma.done [#allocation7], 1536
    $region29: #{tpu_custom_call.1} parent=1 // pred_fallthru
      _
    %v50 = vld [vmem:[#allocation3] sm:$0xff]
    %v51 = vld [vmem:[#allocation3 + $0x8] sm:$0xff]
    %v52 = vld [vmem:[#allocation3 + $0x10] sm:$0xff]
    %v53 = vld [vmem:[#allocation3 + $0x18] sm:$0xff]
    %v54 = vld [vmem:[%s1] sm:$0x1]
    %v56 = vlaneseq
    %v57 = vshrl.u32 %v56, 7
    %v58 = vsub.s32 0, %v57
    %v59 = vrot.slane %v54, %v58
    %v61 = vmul.f32 %v50, %v59
    %v62 = vmul.f32 %v51, %v59
    %v63 = vmul.f32 %v52, %v59
    %v64 = vmul.f32 %v53, %v59
    %v65 = vld [vmem:[%s2] sm:$0x1]
    %v67 = vlaneseq
    %v68 = vshrl.u32 %v67, 7
    %v69 = vsub.s32 0, %v68
    %v70 = vrot.slane %v65, %v69
    %v72 = vadd.f32 %v61, %v70
    %v73 = vadd.f32 %v62, %v70
    %v74 = vadd.f32 %v63, %v70
    %v75 = vadd.f32 %v64, %v70
    %v76 = vmax.f32 %v72, 0.0
    %v77 = vmax.f32 %v73, 0.0
    %v78 = vmax.f32 %v74, 0.0
    %v79 = vmax.f32 %v75, 0.0
    %vm80 = vcmask 516096
    %81 = vst.msk [vmem:[#allocation2] sm:$0x1] %vm80, 0.0
    %82 = vst.msk [vmem:[#allocation2 + $0x18] sm:$0x1] %vm80, 0.0
    %83 = vst.msk [vmem:[#allocation2 + $0x11] sm:$0x1] %vm80, 0.0
    %84 = vst.msk [vmem:[#allocation2 + $0x29] sm:$0x1] %vm80, 0.0
    %vm85 = vcmask 523264
    %86 = vst.msk [vmem:[#allocation2 + $0x1] sm:$0xff] %vm85, %v76
    %87 = vst.msk [vmem:[#allocation2 + $0x9] sm:$0xff] %vm85, %v77
    %88 = vst.msk [vmem:[#allocation2 + $0x19] sm:$0xff] %vm85, %v78
    %89 = vst.msk [vmem:[#allocation2 + $0x21] sm:$0xff] %vm85, %v79
    %v90 = vld [vmem:[#allocation2] sm:$0xff]
    %v91 = vld [vmem:[#allocation2 + $0x8] sm:$0xff]
    %v92 = vld [vmem:[#allocation2 + $0x1] sm:$0xff]
    %v93 = vld [vmem:[#allocation2 + $0x9] sm:$0xff]
    %v94 = vld [vmem:[#allocation2 + $0x2] sm:$0xff]
    %v95 = vld [vmem:[#allocation2 + $0xa] sm:$0xff]
    %98 = vrot.lane.b32.xlu0 %v92, 64
    %v99 = vpop.permute.xlu0 %98
    %100 = vrot.lane.b32.xlu0 %v93, 64
    %v101 = vpop.permute.xlu0 %100
    %v104 = vsel %vm85, %v90, %v99
    %v105 = vsel %vm85, %v91, %v101
    %s106 = scalar_lea.vmem [#allocation2], 24
    %v107 = vld [vmem:[%s106] sm:$0xff]
    %v108 = vld [vmem:[%s106 + $0x8] sm:$0xff]
    %v109 = vld [vmem:[%s106 + $0x1] sm:$0xff]
    %v110 = vld [vmem:[%s106 + $0x9] sm:$0xff]
    %v111 = vld [vmem:[%s106 + $0x2] sm:$0xff]
    %v112 = vld [vmem:[%s106 + $0xa] sm:$0xff]
    %115 = vrot.lane.b32.xlu0 %v109, 64
    %v116 = vpop.permute.xlu0 %115
    %117 = vrot.lane.b32.xlu0 %v110, 64
    %v118 = vpop.permute.xlu0 %117
    %v121 = vsel %vm85, %v107, %v116
    %v122 = vsel %vm85, %v108, %v118
    %v123 = vpack.c.bf16 %v105, %v104
    %v124 = vpack.c.bf16 %v95, %v94
    %v125 = vpack.c.bf16 %v122, %v121
    %v126 = vpack.c.bf16 %v112, %v111
    %v127 = vld [vmem:[#allocation6] sm:$0xf]
    %v128 = vld [vmem:[#allocation6 + $0x4] sm:$0xf]
    %v129 = vld [vmem:[#allocation6 + $0x8] sm:$0xf]
    %v130 = vld [vmem:[#allocation6 + $0xc] sm:$0xf]
    %v131 = vld [vmem:[#allocation6 + $0x10] sm:$0xf]
    %v132 = vld [vmem:[#allocation6 + $0x14] sm:$0xf]
    %v133 = vld [vmem:[#allocation6 + $0x18] sm:$0xf]
    %v134 = vld [vmem:[#allocation6 + $0x1c] sm:$0xf]
    %v135 = vld [vmem:[#allocation6 + $0x20] sm:$0xf]
    %v136 = vld [vmem:[#allocation6 + $0x24] sm:$0xf]
    %v137 = vld [vmem:[#allocation6 + $0x28] sm:$0xf]
    %v138 = vld [vmem:[#allocation6 + $0x2c] sm:$0xf]
    %v139 = vld [vmem:[#allocation6 + $0x30] sm:$0xf]
    %v140 = vld [vmem:[#allocation6 + $0x34] sm:$0xf]
    %v141 = vld [vmem:[#allocation6 + $0x38] sm:$0xf]
    %v142 = vld [vmem:[#allocation6 + $0x3c] sm:$0xf]
    %v143 = vld [vmem:[#allocation6 + $0x40] sm:$0xf]
    %v144 = vld [vmem:[#allocation6 + $0x44] sm:$0xf]
    %v145 = vld [vmem:[#allocation6 + $0x48] sm:$0xf]
    %v146 = vld [vmem:[#allocation6 + $0x4c] sm:$0xf]
    %v147 = vld [vmem:[#allocation6 + $0x50] sm:$0xf]
    %v148 = vld [vmem:[#allocation6 + $0x54] sm:$0xf]
    %v149 = vld [vmem:[#allocation6 + $0x58] sm:$0xf]
    %v150 = vld [vmem:[#allocation6 + $0x5c] sm:$0xf]
    %v151 = vld [vmem:[%s4] sm:$0x1]
    %v153 = vlaneseq
    %v154 = vshrl.u32 %v153, 7
    %v155 = vsub.s32 0, %v154
    %v156 = vrot.slane %v151, %v155
    %v182 = vunpack.c.l.b16 %v127
    %v183 = vunpack.c.l.b16 %v128
    %v184 = vunpack.c.l.b16 %v129
    %v185 = vunpack.c.l.b16 %v130
    %v186 = vunpack.c.l.b16 %v131
    %v187 = vunpack.c.l.b16 %v132
    %v188 = vunpack.c.l.b16 %v133
    %v189 = vunpack.c.l.b16 %v134
    %v190 = vunpack.c.l.b16 %v135
    %v191 = vunpack.c.l.b16 %v136
    %v192 = vunpack.c.l.b16 %v137
    %v193 = vunpack.c.l.b16 %v138
    %v194 = vunpack.c.l.b16 %v139
    %v195 = vunpack.c.l.b16 %v140
    %v196 = vunpack.c.l.b16 %v141
    %v197 = vunpack.c.l.b16 %v142
    %v198 = vunpack.c.l.b16 %v143
    %v199 = vunpack.c.l.b16 %v144
    %v200 = vunpack.c.l.b16 %v145
    %v201 = vunpack.c.l.b16 %v146
    %v202 = vunpack.c.l.b16 %v147
    %v203 = vunpack.c.l.b16 %v148
    %v204 = vunpack.c.l.b16 %v149
    %v205 = vunpack.c.l.b16 %v150
    %v206 = vpack.c.b16 %v183, %v182
    %v207 = vpack.c.b16 %v185, %v184
    %v208 = vpack.c.b16 %v187, %v186
    %v209 = vpack.c.b16 %v189, %v188
    %v210 = vpack.c.b16 %v191, %v190
    %v211 = vpack.c.b16 %v193, %v192
    %v212 = vpack.c.b16 %v195, %v194
    %v213 = vpack.c.b16 %v197, %v196
    %v214 = vpack.c.b16 %v199, %v198
    %v215 = vpack.c.b16 %v201, %v200
    %v216 = vpack.c.b16 %v203, %v202
    %v217 = vpack.c.b16 %v205, %v204
    %v231 = vsel %vm85, %v124, 0
    %v234 = vsel %vm85, %v126, 0
    %236 = vmatprep.subr.bf16.mxu0 0
    %237 = vmatpush1.bf16.msra.mxu0 %v206
    %238 = vmatprep.subr.bf16.mxu0 0
    %239 = vmatpush1.bf16.msra.mxu0 %v207
    %240 = vmatprep.subr.bf16.mxu0 0
    %241 = vmatpush1.bf16.msra.mxu0 %v208
    %242 = vmatprep.subr.bf16.mxu0 0
    %243 = vmatpush1.bf16.msra.mxu0 %v209
    %244 = vmatprep.subr.bf16.mxu0 0
    %245 = vmatpush1.bf16.msra.mxu0 %v210
    %246 = vmatprep.subr.bf16.mxu0 0
    %247 = vmatpush1.bf16.msra.mxu0 %v211
    %248 = vmatprep.subr.bf16.mxu0 0
    %249 = vmatpush1.bf16.msra.mxu0 %v212
    %250 = vmatprep.subr.bf16.mxu0 0
    %251 = vmatpush1.bf16.msra.mxu0 %v213
    %252 = vmatprep.subr.bf16.mxu0 0
    %253 = vmatpush1.bf16.msra.mxu0 %v214
    %254 = vmatprep.subr.bf16.mxu0 0
    %255 = vmatpush1.bf16.msra.mxu0 %v215
    %256 = vmatprep.subr.bf16.mxu0 0
    %257 = vmatpush1.bf16.msra.mxu0 %v216
    %258 = vmatprep.subr.bf16.mxu0 0
    %259 = vmatpush1.bf16.msra.mxu0 %v217
    %260 = vmatprep.subr.bf16.mxu0 0
    %261 = vmatpush1.bf16.msra.mxu0 0
    %262 = vmatprep.subr.bf16.mxu0 0
    %263 = vmatpush1.bf16.msra.mxu0 0
    %264 = vmatprep.subr.bf16.mxu0 0
    %265 = vmatpush1.bf16.msra.mxu0 0
    %266 = vmatprep.subr.bf16.mxu0 0
    %267 = vmatpush1.bf16.msra.mxu0 0
    %268 = vmatprep.mubr.bf16.mxu0 %v231
    %269 = vmatmul.mubr.bf16.gmra.mrb[0].mxu0 %v123
    %v270 = vpop.f32.mrb[0].mxu0
    %v271 = vadd.f32 %v156, %v270
    %v272 = vpop.f32.mrb[0].mxu0
    %v273 = vpop.f32.mrb[0].mxu0
    %v274 = vadd.f32 %v156, %v273
    %v275 = vpop.f32.mrb[0].mxu0
    %276 = vmatprep.mubr.bf16.mxu0 %v234
    %277 = vmatmul.mubr.bf16.gmra.mrb[0].mxu0 %v125
    %v278 = vpop.f32.mrb[0].mxu0
    %v279 = vadd.f32 %v156, %v278
    %v280 = vpop.f32.mrb[0].mxu0
    %v281 = vpop.f32.mrb[0].mxu0
    %v282 = vadd.f32 %v156, %v281
    %v283 = vpop.f32.mrb[0].mxu0
    %284 = vdwg.mxu0
    %285 = vst [vmem:[#allocation8] sm:$0xff] %v271
    %286 = vst [vmem:[#allocation8 + $0x8] sm:$0xff] %v274
    %287 = vst [vmem:[#allocation8 + $0x10] sm:$0xff] %v279
    %288 = vst [vmem:[#allocation8 + $0x18] sm:$0xff] %v282
    // Predicated region
    $region30: #{tpu_custom_call.1} parent=1 // pred_check
      _
    $region31: #{tpu_custom_call.1} parent=1 // pred_check_branch
      %290 = sbr.rel (0) target = $region33
    $region32: #{tpu_custom_call.1} parent=1 // pred_region
      %s292 = ssub.s32 512, 512
      %293 = vsyncadd [#allocation5], %s292
      %s294 = sshll.u32 [#allocation8], 4
      %s295 = int_to_ptr.vmem [resolvable:$true] %s294
      %300 = dma.vmem_to_hbm [thread:$0]  %s295, 512, %s5, [#allocation5], 128, 128, 8
    $region33: #{tpu_custom_call.1} parent=1 // pred_fallthru
      _
    // Predicated region
    $region34: #{tpu_custom_call.1} parent=1 // pred_check
      _
    $region35: #{tpu_custom_call.1} parent=1 // pred_check_branch
      %302 = sbr.rel (0) target = $region37
    $region36: #{tpu_custom_call.1} parent=1 // pred_region
      %303 = dma.done [#allocation5], 512
    $region37: #{tpu_custom_call.1} parent=1 // pred_fallthru
      _
    %304 = vsyncpa [#allocation4], 1
    %305 = vsyncpa [#allocation7], 1
    %306 = vsyncpa [#allocation5], 1

</llo_original>
